<compile_context>
chip_gen: v7x
topology: tpu7x:2x2x1
jax: 0.10.0
libtpu: 0.0.40
codegen_flags: <defaults>
</compile_context>

<pallas_src>
import functools

import jax
import jax.numpy as jnp
from jax.experimental import pallas as pl
from jax.experimental.pallas import tpu as pltpu

EPS = 1e-6  # matches DiceLoss2.eps


def _dice_stats_kernel(logits_ref, target_ref, inter_ref, card_ref,
                       *, rows, lanes, needs_mask):
    """Accumulates per-batch intersection and cardinality over pixel tiles."""
    r_idx = pl.program_id(1)
    l_idx = pl.program_id(2)

    @pl.when((r_idx == 0) & (l_idx == 0))
    def _():
        inter_ref[...] = jnp.zeros_like(inter_ref)
        card_ref[...] = jnp.zeros_like(card_ref)

    x = logits_ref[0].astype(jnp.float32)   # (C, TR, TL)
    t = target_ref[0]                       # (TR, TL) int32
    C, TR, TL = x.shape

    valid = None
    if needs_mask:
        row = jax.lax.broadcasted_iota(jnp.int32, (TR, TL), 0) + r_idx * TR
        lane = jax.lax.broadcasted_iota(jnp.int32, (TR, TL), 1) + l_idx * TL
        valid = (row < rows) & (lane < lanes)            # (TR, TL)
        x = jnp.where(valid[None], x, 0.0)               # kill padded garbage

    # Numerically-stable softmax over the class axis (axis 0 is non-minor, so
    # these reductions are pure element-wise VPU ops across C slabs).
    m = jnp.max(x, axis=0, keepdims=True)                # (1, TR, TL)
    e = jnp.exp(x - m)                                   # (C, TR, TL)
    s = jnp.sum(e, axis=0)                               # (TR, TL)
    inv_s = pl.reciprocal(s, approx=True)                # (TR, TL), EUP

    cls = jax.lax.broadcasted_iota(jnp.int32, (C, TR, TL), 0)
    onehot = (cls == t[None]).astype(jnp.float32)        # (C, TR, TL)

    e_t = jnp.sum(e * onehot, axis=0)                    # exp at target class
    prob_sum = s * inv_s                                 # sum_c softmax (~1)
    onehot_sum = jnp.sum(onehot, axis=0)                 # sum_c one-hot (~1)

    inter_tile = e_t * inv_s                             # softmax prob @ target
    card_tile = prob_sum + onehot_sum
    if needs_mask:
        validf = valid.astype(jnp.float32)
        inter_tile = inter_tile * validf
        card_tile = card_tile * validf

    inter_ref[...] = inter_ref[...] + jnp.sum(inter_tile)
    card_ref[...] = card_ref[...] + jnp.sum(card_tile)


def _choose_layout(P, C, itemsize):
    """Pick a free (R, L) view of the pixel axis and a (TR, TL) block of it."""
    budget = 1 << 20  # ~1 MiB per logits block (Pallas double-buffers it)
    if P % 128 == 0:
        L = 128
        R = P // L
        TL = L
        if R <= 8:
            TR = R                                      # block == full row dim
        else:
            tr = max(8, (budget // (C * L * itemsize) // 8) * 8)
            TR = min(tr, (R // 8) * 8)                  # multiple of 8, <= R
    else:
        # TODO(synk): when H*W is not a multiple of 128, pixels live on lanes
        # only (sublane dim = 1), so vregs are under-occupied in this path.
        R, L, TR = 1, P, 1
        if L < 128:
            TL = L                                      # block == full lane dim
        else:
            tl = max(128, (budget // (C * itemsize) // 128) * 128)
            TL = min(tl, (L // 128) * 128)              # multiple of 128, <= L
    return R, L, TR, TL


@jax.jit
def dice_loss2(logits, target):
    """Pallas implementation of DiceLoss2.forward(input, target)."""
    B, C, H, W = logits.shape
    P = H * W
    R, L, TR, TL = _choose_layout(P, C, jnp.dtype(logits.dtype).itemsize)
    needs_mask = (R % TR != 0) or (L % TL != 0)

    x = logits.reshape(B, C, R, L)                   # free view of NCHW
    t = target.reshape(B, R, L).astype(jnp.int32)    # free view (+ cast)

    grid = (B, pl.cdiv(R, TR), pl.cdiv(L, TL))
    kernel = functools.partial(
        _dice_stats_kernel, rows=R, lanes=L, needs_mask=needs_mask)

    inter, card = pl.pallas_call(
        kernel,
        out_shape=(
            jax.ShapeDtypeStruct((B, 1, 1), jnp.float32),
            jax.ShapeDtypeStruct((B, 1, 1), jnp.float32),
        ),
        grid_spec=pltpu.PrefetchScalarGridSpec(
            num_scalar_prefetch=0,
            grid=grid,
            in_specs=[
                pl.BlockSpec((1, C, TR, TL), lambda b, r, l: (b, 0, r, l)),
                pl.BlockSpec((1, TR, TL), lambda b, r, l: (b, r, l)),
            ],
            out_specs=[
                pl.BlockSpec((1, 1, 1), lambda b, r, l: (b, 0, 0)),
                pl.BlockSpec((1, 1, 1), lambda b, r, l: (b, 0, 0)),
            ],
        ),
        compiler_params=pltpu.CompilerParams(
            dimension_semantics=("parallel", "arbitrary", "arbitrary")
        ),
    )(x, t)

    inter = inter[:, 0, 0]
    card = card[:, 0, 0]
    dice = 2.0 * inter / (card + EPS)
    return jnp.mean(1.0 - dice)


# ----------------------------- pure-JAX reference ---------------------------
def _ref_dice_loss2(logits, target):
    probs = jax.nn.softmax(logits.astype(jnp.float32), axis=1)
    onehot = jax.nn.one_hot(target, logits.shape[1], dtype=jnp.float32)
    onehot = jnp.transpose(onehot, (0, 3, 1, 2))
    inter = jnp.sum(probs * onehot, axis=(1, 2, 3))
    card = jnp.sum(probs + onehot, axis=(1, 2, 3))
    dice = 2.0 * inter / (card + EPS)
    return jnp.mean(1.0 - dice)


if __name__ == "__main__":
    B, C, H, W = 2, 4, 16, 16
    key = jax.random.PRNGKey(0)
    k1, k2 = jax.random.split(key)
    logits = jax.random.normal(k1, (B, C, H, W), dtype=jnp.float32)
    target = jax.random.randint(k2, (B, H, W), 0, C, dtype=jnp.int32)

    loss = jax.block_until_ready(dice_loss2(logits, target))
    ref = jax.block_until_ready(_ref_dice_loss2(logits, target))
    assert abs(float(loss) - float(ref)) < 1e-3, (float(loss), float(ref))

    print("KERNEL_OK")
</pallas_src>

<mosaic_0001>
module attributes {stable_mosaic.version = 11 : i64} {
  func.func @_dice_stats_kernel(%arg0: i32, %arg1: i32, %arg2: i32, %arg3: memref<1x4x2x128xf32, #tpu.memory_space<vmem>>, %arg4: memref<1x2x128xi32, #tpu.memory_space<vmem>>, %arg5: memref<1x1x1xf32, #tpu.memory_space<vmem>>, %arg6: memref<1x1x1xf32, #tpu.memory_space<vmem>>) attributes {dimension_semantics = [#tpu.dimension_semantics<parallel>, #tpu.dimension_semantics<arbitrary>, #tpu.dimension_semantics<arbitrary>], iteration_bounds = array<i64: 2, 1, 1>, scalar_prefetch = 0 : i64, scratch_operands = 0 : i64, tpu.core_type = #tpu.core_type<tc>, window_params = [{transform_indices = @transform_0, window_bounds = array<i64: 1, 4, 2, 128>}, {transform_indices = @transform_1, window_bounds = array<i64: 1, 2, 128>}, {transform_indices = @transform_2, window_bounds = array<i64: 1, 1, 1>}, {transform_indices = @transform_3, window_bounds = array<i64: 1, 1, 1>}]} {
    %c0_i32 = arith.constant 0 : i32
    %0 = arith.cmpi eq, %arg1, %c0_i32 : i32
    %c0_i32_0 = arith.constant 0 : i32
    %1 = arith.cmpi eq, %arg2, %c0_i32_0 : i32
    %2 = arith.andi %0, %1 : i1
    %3 = arith.extui %2 : i1 to i32
    %c0_i32_1 = arith.constant 0 : i32
    %4 = arith.cmpi ne, %3, %c0_i32_1 : i32
    scf.if %4 {
      %cst_25 = arith.constant 0.000000e+00 : f32
      %44 = vector.broadcast %cst_25 : f32 to vector<1x1x1xf32>
      %c0_26 = arith.constant 0 : index
      %c0_27 = arith.constant 0 : index
      %c0_28 = arith.constant 0 : index
      %45 = vector.load %arg5[%c0_26, %c0_27, %c0_28] : memref<1x1x1xf32, #tpu.memory_space<vmem>>, vector<1x1x1xf32>
      tpu.vector_store %arg5[%c0_26, %c0_27, %c0_28], %44 {strides = array<i32>} : memref<1x1x1xf32, #tpu.memory_space<vmem>>, vector<1x1x1xf32>,
      %cst_29 = arith.constant 0.000000e+00 : f32
      %46 = vector.broadcast %cst_29 : f32 to vector<1x1x1xf32>
      %c0_30 = arith.constant 0 : index
      %c0_31 = arith.constant 0 : index
      %c0_32 = arith.constant 0 : index
      %47 = vector.load %arg6[%c0_30, %c0_31, %c0_32] : memref<1x1x1xf32, #tpu.memory_space<vmem>>, vector<1x1x1xf32>
      tpu.vector_store %arg6[%c0_30, %c0_31, %c0_32], %46 {strides = array<i32>} : memref<1x1x1xf32, #tpu.memory_space<vmem>>, vector<1x1x1xf32>,
    } else {
    }
    %c0 = arith.constant 0 : index
    %c0_2 = arith.constant 0 : index
    %c0_3 = arith.constant 0 : index
    %c0_4 = arith.constant 0 : index
    %5 = vector.load %arg3[%c0, %c0_2, %c0_3, %c0_4] : memref<1x4x2x128xf32, #tpu.memory_space<vmem>>, vector<1x4x2x128xf32>
    %6 = vector.shape_cast %5 : vector<1x4x2x128xf32> to vector<4x2x128xf32>
    %c0_5 = arith.constant 0 : index
    %c0_6 = arith.constant 0 : index
    %c0_7 = arith.constant 0 : index
    %7 = vector.load %arg4[%c0_5, %c0_6, %c0_7] : memref<1x2x128xi32, #tpu.memory_space<vmem>>, vector<1x2x128xi32>
    %8 = vector.shape_cast %7 : vector<1x2x128xi32> to vector<2x128xi32>
    %cst = arith.constant dense<0xFF800000> : vector<2x128xf32>
    %9 = vector.multi_reduction <maximumf>, %6, %cst [0] : vector<4x2x128xf32> to vector<2x128xf32>
    %10 = vector.shape_cast %9 : vector<2x128xf32> to vector<1x2x128xf32>
    %11 = vector.broadcast %10 : vector<1x2x128xf32> to vector<4x2x128xf32>
    %12 = arith.subf %6, %11 : vector<4x2x128xf32>
    %13 = math.exp %12 : vector<4x2x128xf32>
    %cst_8 = arith.constant dense<0.000000e+00> : vector<2x128xf32>
    %14 = vector.multi_reduction <add>, %13, %cst_8 [0] : vector<4x2x128xf32> to vector<2x128xf32>
    %15 = tpu.reciprocal %14 {approx = true} : vector<2x128xf32> -> vector<2x128xf32>
    %16 = tpu.iota {dimensions = array<i32: 0>} : vector<4x2x128xi32>
    %17 = vector.shape_cast %8 : vector<2x128xi32> to vector<1x2x128xi32>
    %18 = vector.broadcast %17 : vector<1x2x128xi32> to vector<4x2x128xi32>
    %19 = arith.cmpi eq, %16, %18 : vector<4x2x128xi32>
    %20 = arith.extui %19 : vector<4x2x128xi1> to vector<4x2x128xi32>
    %21 = arith.sitofp %20 : vector<4x2x128xi32> to vector<4x2x128xf32>
    %22 = arith.mulf %13, %21 : vector<4x2x128xf32>
    %cst_9 = arith.constant dense<0.000000e+00> : vector<2x128xf32>
    %23 = vector.multi_reduction <add>, %22, %cst_9 [0] : vector<4x2x128xf32> to vector<2x128xf32>
    %24 = arith.mulf %14, %15 : vector<2x128xf32>
    %cst_10 = arith.constant dense<0.000000e+00> : vector<2x128xf32>
    %25 = vector.multi_reduction <add>, %21, %cst_10 [0] : vector<4x2x128xf32> to vector<2x128xf32>
    %26 = arith.mulf %23, %15 : vector<2x128xf32>
    %27 = arith.addf %24, %25 : vector<2x128xf32>
    %c0_11 = arith.constant 0 : index
    %c0_12 = arith.constant 0 : index
    %c0_13 = arith.constant 0 : index
    %28 = vector.load %arg5[%c0_11, %c0_12, %c0_13] : memref<1x1x1xf32, #tpu.memory_space<vmem>>, vector<1x1x1xf32>
    %29 = vector.shape_cast %26 : vector<2x128xf32> to vector<1x2x128xf32>
    %cst_14 = arith.constant dense<0.000000e+00> : vector<1xf32>
    %30 = vector.multi_reduction <add>, %29, %cst_14 [1, 2] : vector<1x2x128xf32> to vector<1xf32>
    %31 = vector.shape_cast %30 : vector<1xf32> to vector<1x1x1xf32>
    %32 = vector.extract %31[0, 0, 0] : f32 from vector<1x1x1xf32>
    %33 = vector.broadcast %32 : f32 to vector<1x1x1xf32>
    %34 = arith.addf %28, %33 : vector<1x1x1xf32>
    %c0_15 = arith.constant 0 : index
    %c0_16 = arith.constant 0 : index
    %c0_17 = arith.constant 0 : index
    %35 = vector.load %arg5[%c0_15, %c0_16, %c0_17] : memref<1x1x1xf32, #tpu.memory_space<vmem>>, vector<1x1x1xf32>
    tpu.vector_store %arg5[%c0_15, %c0_16, %c0_17], %34 {strides = array<i32>} : memref<1x1x1xf32, #tpu.memory_space<vmem>>, vector<1x1x1xf32>,
    %c0_18 = arith.constant 0 : index
    %c0_19 = arith.constant 0 : index
    %c0_20 = arith.constant 0 : index
    %36 = vector.load %arg6[%c0_18, %c0_19, %c0_20] : memref<1x1x1xf32, #tpu.memory_space<vmem>>, vector<1x1x1xf32>
    %37 = vector.shape_cast %27 : vector<2x128xf32> to vector<1x2x128xf32>
    %cst_21 = arith.constant dense<0.000000e+00> : vector<1xf32>
    %38 = vector.multi_reduction <add>, %37, %cst_21 [1, 2] : vector<1x2x128xf32> to vector<1xf32>
    %39 = vector.shape_cast %38 : vector<1xf32> to vector<1x1x1xf32>
    %40 = vector.extract %39[0, 0, 0] : f32 from vector<1x1x1xf32>
    %41 = vector.broadcast %40 : f32 to vector<1x1x1xf32>
    %42 = arith.addf %36, %41 : vector<1x1x1xf32>
    %c0_22 = arith.constant 0 : index
    %c0_23 = arith.constant 0 : index
    %c0_24 = arith.constant 0 : index
    %43 = vector.load %arg6[%c0_22, %c0_23, %c0_24] : memref<1x1x1xf32, #tpu.memory_space<vmem>>, vector<1x1x1xf32>
    tpu.vector_store %arg6[%c0_22, %c0_23, %c0_24], %42 {strides = array<i32>} : memref<1x1x1xf32, #tpu.memory_space<vmem>>, vector<1x1x1xf32>,
    return
  }
  func.func @transform_0(%arg0: i32, %arg1: i32, %arg2: i32) -> (i32, i32, i32, i32) {
    %c0_i32 = arith.constant 0 : i32
    %c0_i32_0 = arith.constant 0 : i32
    return %arg0, %c0_i32, %arg1, %arg2 : i32, i32, i32, i32
  }
  func.func @transform_1(%arg0: i32, %arg1: i32, %arg2: i32) -> (i32, i32, i32) {
    %c0_i32 = arith.constant 0 : i32
    return %arg0, %arg1, %arg2 : i32, i32, i32
  }
  func.func @transform_2(%arg0: i32, %arg1: i32, %arg2: i32) -> (i32, i32, i32) {
    %c0_i32 = arith.constant 0 : i32
    %c0_i32_0 = arith.constant 0 : i32
    %c0_i32_1 = arith.constant 0 : i32
    return %arg0, %c0_i32, %c0_i32_0 : i32, i32, i32
  }
  func.func @transform_3(%arg0: i32, %arg1: i32, %arg2: i32) -> (i32, i32, i32) {
    %c0_i32 = arith.constant 0 : i32
    %c0_i32_0 = arith.constant 0 : i32
    %c0_i32_1 = arith.constant 0 : i32
    return %arg0, %c0_i32, %c0_i32_0 : i32, i32, i32
  }
}

</mosaic_0001>

<llo_original>
// kernel: dice_loss2.1
$region0: #{dice_loss2.1}
  #allocation0 [shape = 'u32[]', space=smem, size = 0x4, offset = 0x4, fixed_abs, tag = 'smem constant byte address 0x4 - core index']
  #allocation1 [shape = 'u32[144,128]{1,0:T(1,128)}', space=vmem, size = 0x12000, scoped, tag = 'internal scratch']
  %s0 = inlined_call_operand.vmem [shape: f32[2,4,2,128], index: 0, kind: input, shape index: {}]
  %s1 = inlined_call_operand.vmem [shape: s32[2,2,128], index: 1, kind: input, shape index: {}]
  %s2 = inlined_call_operand.vmem [shape: f32[2,1,1], index: 2, kind: output, shape index: {0}]
  %s3 = inlined_call_operand.vmem [shape: f32[2,1,1], index: 3, kind: output, shape index: {1}]
  %4 = xla_tuple %s2, %s3
  %s5 = sld [smem:[#allocation0]]
  $region53: #{dice_loss2.1} parent=0
    _
  %s7 = ssub.s32 1, %s5
  %s8 = scalar_select 0, %s7, %s5
  loop: start=0, step=1, limit=4
  $region2: #{dice_loss2.1} parent=0 // loop_pre_header
    _
  $region3: #{dice_loss2.1} parent=0 // loop_header
    %s10 = sphi 0, %s14
    %p11 = scmp.ge.s32.totalorder %s10, 4
    %s17 = sphi 0, %s36
    %s18 = sphi 0, %s32
    %s19 = sphi 0, %s28
    %s20 = sphi 0, %s17
    %s21 = sphi 0, %s18
    %s22 = sphi 0, %s19
    %s23 = sphi 0, %s20
    %s24 = sphi 0, %s21
    %s25 = sphi 0, %s22
    %s43 = sphi 0, %s45
    %s46 = sphi 0, %s43
    %s47 = sphi 0, %s46
    %s63 = sphi 0, %s47
    %s73 = sphi 0, %s75
    %s76 = sphi 0, %s73
    %s77 = sphi 0, %s76
    %s93 = sphi 0, %s77
    %s99 = sphi 0, %s101
    %s102 = sphi 0, %s99
    %s103 = sphi 0, %s102
    %s119 = sphi 0, %s103
    %s125 = sphi 0, %s127
    %s128 = sphi 0, %s125
    %s129 = sphi 0, %s128
    %s145 = sphi 0, %s129
  $region4: #{dice_loss2.1} parent=0 // loop_header_branch
    %13 = sbr.rel (%p11) target = $region8
  $region5: #{dice_loss2.1} parent=0 // loop_body
    %s15 = ssub.s32 %s10, 1
    %s16 = ssub.s32 %s10, 2
    %s26 = sadd.s32 1, %s19
    %p27 = scmp.ge.s32.totalorder %s26, 1
    %s28 = scalar_select %p27, 0, %s26
    %s29 = sadd.s32 1, %s18
    %s30 = scalar_select %p27, %s29, %s18
    %p31 = scmp.ge.s32.totalorder %s30, 1
    %s32 = scalar_select %p31, 0, %s30
    %s33 = sadd.s32 1, %s17
    %s34 = scalar_select %p31, %s33, %s17
    %p35 = scmp.ge.s32.totalorder %s34, 2
    %s36 = scalar_select %p35, 0, %s34
    %s37 = ssub.s32 %s17, %s36
    %s38 = ssub.s32 %s18, %s32
    %s39 = sor.u32 %s37, %s38
    %s40 = ssub.s32 %s19, %s28
    %s41 = sor.u32 %s39, %s40
    %p42 = scmp.eq.s32.totalorder %s41, 0
    %s44 = sadd.s32 %s43, 1
    %s45 = scalar_select %p42, %s43, %s44
    %p48 = pneg %p42
    %p49 = scmp.eq.s32.totalorder %s10, 1
    %p50 = por %p48, %p49
    %p51 = scmp.ne.s32.totalorder %s43, %s46
    %p52 = scmp.eq.s32.totalorder %s10, 0
    %p53 = por %p51, %p52
    %p54 = scmp.ne.s32.totalorder %s43, %s46
    %p55 = scmp.eq.s32.totalorder %s15, 1
    %p56 = por %p54, %p55
    %p57 = scmp.ne.s32.totalorder %s46, %s47
    %p58 = scmp.eq.s32.totalorder %s15, 0
    %p59 = por %p57, %p58
    %p60 = scmp.ne.s32.totalorder %s46, %s47
    %p61 = scmp.eq.s32.totalorder %s16, 1
    %p62 = por %p60, %p61
    %p64 = scmp.ne.s32.totalorder %s47, %s63
    %p65 = scmp.eq.s32.totalorder %s16, 0
    %p66 = por %p64, %p65
    %s67 = ssub.s32 %s17, %s36
    %s68 = ssub.s32 %s18, %s32
    %s69 = sor.u32 %s67, %s68
    %s70 = ssub.s32 %s19, %s28
    %s71 = sor.u32 %s69, %s70
    %p72 = scmp.eq.s32.totalorder %s71, 0
    %s74 = sadd.s32 %s73, 1
    %s75 = scalar_select %p72, %s73, %s74
    %p78 = pneg %p72
    %p79 = scmp.eq.s32.totalorder %s10, 1
    %p80 = por %p78, %p79
    %p81 = scmp.ne.s32.totalorder %s73, %s76
    %p82 = scmp.eq.s32.totalorder %s10, 0
    %p83 = por %p81, %p82
    %p84 = scmp.ne.s32.totalorder %s73, %s76
    %p85 = scmp.eq.s32.totalorder %s15, 1
    %p86 = por %p84, %p85
    %p87 = scmp.ne.s32.totalorder %s76, %s77
    %p88 = scmp.eq.s32.totalorder %s15, 0
    %p89 = por %p87, %p88
    %p90 = scmp.ne.s32.totalorder %s76, %s77
    %p91 = scmp.eq.s32.totalorder %s16, 1
    %p92 = por %p90, %p91
    %p94 = scmp.ne.s32.totalorder %s77, %s93
    %p95 = scmp.eq.s32.totalorder %s16, 0
    %p96 = por %p94, %p95
    %s97 = ssub.s32 %s17, %s36
    %p98 = scmp.eq.s32.totalorder %s97, 0
    %s100 = sadd.s32 %s99, 1
    %s101 = scalar_select %p98, %s99, %s100
    %p104 = pneg %p98
    %p105 = scmp.eq.s32.totalorder %s10, 1
    %p106 = por %p104, %p105
    %p107 = scmp.ne.s32.totalorder %s99, %s102
    %p108 = scmp.eq.s32.totalorder %s10, 0
    %p109 = por %p107, %p108
    %p110 = scmp.ne.s32.totalorder %s99, %s102
    %p111 = scmp.eq.s32.totalorder %s15, 1
    %p112 = por %p110, %p111
    %p113 = scmp.ne.s32.totalorder %s102, %s103
    %p114 = scmp.eq.s32.totalorder %s15, 0
    %p115 = por %p113, %p114
    %p116 = scmp.ne.s32.totalorder %s102, %s103
    %p117 = scmp.eq.s32.totalorder %s16, 1
    %p118 = por %p116, %p117
    %p120 = scmp.ne.s32.totalorder %s103, %s119
    %p121 = scmp.eq.s32.totalorder %s16, 0
    %p122 = por %p120, %p121
    %s123 = ssub.s32 %s17, %s36
    %p124 = scmp.eq.s32.totalorder %s123, 0
    %s126 = sadd.s32 %s125, 1
    %s127 = scalar_select %p124, %s125, %s126
    %p130 = pneg %p124
    %p131 = scmp.eq.s32.totalorder %s10, 1
    %p132 = por %p130, %p131
    %p133 = scmp.ne.s32.totalorder %s125, %s128
    %p134 = scmp.eq.s32.totalorder %s10, 0
    %p135 = por %p133, %p134
    %p136 = scmp.ne.s32.totalorder %s125, %s128
    %p137 = scmp.eq.s32.totalorder %s15, 1
    %p138 = por %p136, %p137
    %p139 = scmp.ne.s32.totalorder %s128, %s129
    %p140 = scmp.eq.s32.totalorder %s15, 0
    %p141 = por %p139, %p140
    %p142 = scmp.ne.s32.totalorder %s128, %s129
    %p143 = scmp.eq.s32.totalorder %s16, 1
    %p144 = por %p142, %p143
    %p146 = scmp.ne.s32.totalorder %s129, %s145
    %p147 = scmp.eq.s32.totalorder %s16, 0
    %p148 = por %p146, %p147
    %p149 = scmp.le.s32.totalorder 1, %s10
    %p150 = scmp.lt.s32.totalorder %s10, 3
    %p151 = pnand %p149, %p150
    %p152 = pneg %p151
    // Predicated region
    $region9: #{dice_loss2.1} parent=5 // pred_check
      _
    $region10: #{dice_loss2.1} parent=5 // pred_check_branch
      %154 = sbr.rel (%p151) target = $region12
    $region11: #{dice_loss2.1} parent=5 // pred_region
      %s155 = ssub.s32 %s10, 1
    $region12: #{dice_loss2.1} parent=5 // pred_fallthru
      _
    %p156 = scmp.lt.s32.totalorder %s10, 2
    // Predicated region
    $region13: #{dice_loss2.1} parent=5 // pred_check
      %p157 = pneg %p156
    $region14: #{dice_loss2.1} parent=5 // pred_check_branch
      %159 = sbr.rel (%p157) target = $region16
    $region15: #{dice_loss2.1} parent=5 // pred_region
      // Predicated region
      $region17: #{dice_loss2.1} parent=15 // pred_check
        %p160 = pneg %p53
      $region18: #{dice_loss2.1} parent=15 // pred_check_branch
        %162 = sbr.rel (%p160) target = $region20
      $region19: #{dice_loss2.1} parent=15 // pred_region
        %p163 = scmp.lt.s32.totalorder %s17, 1
        %s164 = scalar_select %p163, %s17, 1
        %p165 = scmp.lt.s32.totalorder %s18, 0
        %s166 = scalar_select %p165, %s18, 0
        %p167 = scmp.lt.s32.totalorder %s19, 0
        %s168 = scalar_select %p167, %s19, 0
        %s169 = sadd.s32 %s168, %s166
        %s170 = smul.addr %s164, 4
        %s171 = sadd.s32 %s169, %s170
        %s172 = smul.addr %s171, 2
        %s173 = scalar_lea.vmem %s0, %s172
      $region20: #{dice_loss2.1} parent=15 // pred_fallthru
        _
      // Predicated region
      $region21: #{dice_loss2.1} parent=15 // pred_check
        %p174 = pneg %p83
      $region22: #{dice_loss2.1} parent=15 // pred_check_branch
        %176 = sbr.rel (%p174) target = $region24
      $region23: #{dice_loss2.1} parent=15 // pred_region
        %p177 = scmp.lt.s32.totalorder %s17, 1
        %s178 = scalar_select %p177, %s17, 1
        %p179 = scmp.lt.s32.totalorder %s18, 0
        %s180 = scalar_select %p179, %s18, 0
        %p181 = scmp.lt.s32.totalorder %s19, 0
        %s182 = scalar_select %p181, %s19, 0
        %s183 = sadd.s32 %s182, %s180
        %s184 = sadd.s32 %s183, %s178
        %s185 = smul.addr %s184, 2
        %s186 = scalar_lea.vmem %s1, %s185
      $region24: #{dice_loss2.1} parent=15 // pred_fallthru
        _
    $region16: #{dice_loss2.1} parent=5 // pred_fallthru
      _
    %p187 = scmp.le.s32.totalorder 1, %s10
    %p188 = scmp.lt.s32.totalorder %s10, 3
    %p189 = pnand %p187, %p188
    %p190 = pneg %p189
    // Predicated region
    $region25: #{dice_loss2.1} parent=5 // pred_check
      _
    $region26: #{dice_loss2.1} parent=5 // pred_check_branch
      %192 = sbr.rel (%p189) target = $region28
    $region27: #{dice_loss2.1} parent=5 // pred_region
      %s193 = ssub.s32 %s10, 1
      %p194 = scmp.lt.s32.totalorder %s20, 1
      %s195 = scalar_select %p194, %s20, 1
      %p196 = scmp.lt.s32.totalorder %s21, 0
      %s197 = scalar_select %p196, %s21, 0
      %p198 = scmp.lt.s32.totalorder %s22, 0
      %s199 = scalar_select %p198, %s22, 0
      %s200 = sadd.s32 %s199, %s197
      %s201 = smul.addr %s195, 4
      %s202 = sadd.s32 %s200, %s201
      %s203 = smul.addr %s202, 2
      %s204 = scalar_lea.vmem %s0, %s203
      %p205 = pneg %p59
      %p206 = pneg %p56
      %p207 = scmp.lt.s32.totalorder %s20, 1
      %s208 = scalar_select %p207, %s20, 1
      %p209 = scmp.lt.s32.totalorder %s21, 0
      %s210 = scalar_select %p209, %s21, 0
      %p211 = scmp.lt.s32.totalorder %s22, 0
      %s212 = scalar_select %p211, %s22, 0
      %s213 = sadd.s32 %s212, %s210
      %s214 = sadd.s32 %s213, %s208
      %s215 = smul.addr %s214, 2
      %s216 = scalar_lea.vmem %s1, %s215
      %p217 = pneg %p89
      %p218 = pneg %p86
      %p219 = pneg %p115
      %p220 = pneg %p112
      %p221 = scmp.lt.s32.totalorder %s20, 1
      %s222 = scalar_select %p221, %s20, 1
      %s223 = scalar_lea.vmem %s2, %s222
      %p224 = pneg %p141
      %p225 = pneg %p138
      %p226 = scmp.lt.s32.totalorder %s20, 1
      %s227 = scalar_select %p226, %s20, 1
      %s228 = scalar_lea.vmem %s3, %s227
      %p229 = scmp.lt.s32.totalorder %s20, 1
      %s230 = scalar_select %p229, %s20, 1
      %p231 = scmp.lt.s32.totalorder %s21, 0
      %s232 = scalar_select %p231, %s21, 0
      %p233 = scmp.lt.s32.totalorder %s22, 0
      %s234 = scalar_select %p233, %s22, 0
      %s235 = sadd.s32 %s234, %s232
      %s236 = smul.addr %s230, 4
      %s237 = sadd.s32 %s235, %s236
      %s238 = smul.addr %s237, 2
      %s239 = scalar_lea.vmem %s0, %s238
      %p240 = scmp.lt.s32.totalorder %s20, 1
      %s241 = scalar_select %p240, %s20, 1
      %p242 = scmp.lt.s32.totalorder %s21, 0
      %s243 = scalar_select %p242, %s21, 0
      %p244 = scmp.lt.s32.totalorder %s22, 0
      %s245 = scalar_select %p244, %s22, 0
      %s246 = sadd.s32 %s245, %s243
      %s247 = sadd.s32 %s246, %s241
      %s248 = smul.addr %s247, 2
      %s249 = scalar_lea.vmem %s1, %s248
      %p250 = scmp.lt.s32.totalorder %s20, 1
      %s251 = scalar_select %p250, %s20, 1
      %s252 = scalar_lea.vmem %s2, %s251
      %p253 = scmp.lt.s32.totalorder %s20, 1
      %s254 = scalar_select %p253, %s20, 1
      %s255 = scalar_lea.vmem %s3, %s254
      %p256 = scmp.eq.s32.totalorder %s21, 0
      %p257 = scmp.eq.s32.totalorder %s22, 0
      %p258 = pnand %p256, %p257
      %p259 = pneg %p258
      // Predicated region
      $region29: #{dice_loss2.1} parent=27 // pred_check
        _
      $region30: #{dice_loss2.1} parent=27 // pred_check_branch
        %261 = sbr.rel (%p258) target = $region32
      $region31: #{dice_loss2.1} parent=27 // pred_region
        %vm262 = vcmask 0
        %263 = vst.msk [vmem:[%s252] sm:$0x1] %vm262, 0.0
        %264 = vst.msk [vmem:[%s255] sm:$0x1] %vm262, 0.0
      $region32: #{dice_loss2.1} parent=27 // pred_fallthru
        _
      %v265 = vld [vmem:[%s239] sm:$0x3]
      %v266 = vld [vmem:[%s239 + $0x2] sm:$0x3]
      %v267 = vld [vmem:[%s239 + $0x4] sm:$0x3]
      %v268 = vld [vmem:[%s239 + $0x6] sm:$0x3]
      %v269 = vld [vmem:[%s249] sm:$0x3]
      %vm270 = vcmask 1041408
      %v271 = vsel %vm270, %v265, -inf
      %v272 = vsel %vm270, %v266, -inf
      %v273 = vsel %vm270, %v267, -inf
      %v274 = vsel %vm270, %v268, -inf
      %v275 = vmax.f32 %v271, %v272
      %v276 = vmax.f32 %v273, %v274
      %v277 = vmax.f32 %v275, %v276
      %v278 = vsub.f32 %v265, %v277
      %v279 = vsub.f32 %v266, %v277
      %v280 = vsub.f32 %v267, %v277
      %v281 = vsub.f32 %v268, %v277
      %v282 = vmul.f32 %v278, 1.442695
      %v283 = vpow.pop %v282
      %v284 = vmul.f32 %v279, 1.442695
      %v285 = vpow.pop %v284
      %v286 = vmul.f32 %v280, 1.442695
      %v287 = vpow.pop %v286
      %v288 = vmul.f32 %v281, 1.442695
      %v289 = vpow.pop %v288
      %v290 = vsel %vm270, %v283, 0.0
      %v291 = vsel %vm270, %v285, 0.0
      %v292 = vadd.f32 %v290, %v291
      %v293 = vsel %vm270, %v287, 0.0
      %v294 = vadd.f32 %v292, %v293
      %v295 = vsel %vm270, %v289, 0.0
      %v296 = vadd.f32 %v294, %v295
      %v297 = vrcp.pop %v296
      %vm298 = vcmp.eq.s32.totalorder %v269, 0
      %vm299 = vcmp.eq.s32.totalorder %v269, 1
      %vm300 = vcmp.eq.s32.totalorder %v269, 2
      %vm301 = vcmp.eq.s32.totalorder %v269, 3
      %v302 = vsel %vm298, 1, 0
      %v303 = vsel %vm299, 1, 0
      %v304 = vsel %vm300, 1, 0
      %v305 = vsel %vm301, 1, 0
      %v306 = vcvt.s32.f32 %v302
      %v307 = vcvt.s32.f32 %v303
      %v308 = vcvt.s32.f32 %v304
      %v309 = vcvt.s32.f32 %v305
      %v310 = vmul.f32 %v283, %v306
      %v311 = vmul.f32 %v285, %v307
      %v312 = vmul.f32 %v287, %v308
      %v313 = vmul.f32 %v289, %v309
      %v314 = vsel %vm270, %v310, 0.0
      %v315 = vsel %vm270, %v311, 0.0
      %v316 = vadd.f32 %v314, %v315
      %v317 = vsel %vm270, %v312, 0.0
      %v318 = vadd.f32 %v316, %v317
      %v319 = vsel %vm270, %v313, 0.0
      %v320 = vadd.f32 %v318, %v319
      %v321 = vmul.f32 %v296, %v297
      %v322 = vsel %vm270, %v306, 0.0
      %v323 = vsel %vm270, %v307, 0.0
      %v324 = vadd.f32 %v322, %v323
      %v325 = vsel %vm270, %v308, 0.0
      %v326 = vadd.f32 %v324, %v325
      %v327 = vsel %vm270, %v309, 0.0
      %v328 = vadd.f32 %v326, %v327
      %v329 = vmul.f32 %v320, %v297
      %v330 = vadd.f32 %v321, %v328
      %v331 = vld [vmem:[%s252] sm:$0x1]
      %v332 = vsel %vm270, %v329, 0.0
      %333 = vadd.xlane.f32.xlu0 %v332
      %v334 = vpop.xlane.xlu0 %333
      %v335 = vrot.slane %v334, 4
      %v336 = vadd.f32 %v334, %v335
      %v337 = vrot.slane %v336, 2
      %v338 = vadd.f32 %v336, %v337
      %v339 = vrot.slane %v338, 1
      %v340 = vadd.f32 %v338, %v339
      %s341 = vtos %v340
      %v342 = vstv %s341
      %v343 = vadd.f32 %v331, %v342
      %vm344 = vcmask 0
      %345 = vst.msk [vmem:[%s252] sm:$0x1] %vm344, %v343
      %v346 = vld [vmem:[%s255] sm:$0x1]
      %v347 = vsel %vm270, %v330, 0.0
      %348 = vadd.xlane.f32.xlu0 %v347
      %v349 = vpop.xlane.xlu0 %348
      %v350 = vrot.slane %v349, 4
      %v351 = vadd.f32 %v349, %v350
      %v352 = vrot.slane %v351, 2
      %v353 = vadd.f32 %v351, %v352
      %v354 = vrot.slane %v353, 1
      %v355 = vadd.f32 %v353, %v354
      %s356 = vtos %v355
      %v357 = vstv %s356
      %v358 = vadd.f32 %v346, %v357
      %359 = vst.msk [vmem:[%s255] sm:$0x1] %vm344, %v358
      %p360 = scmp.lt.s32.totalorder %s20, 1
      %s361 = scalar_select %p360, %s20, 1
      %s362 = scalar_lea.vmem %s2, %s361
      %p363 = scmp.lt.s32.totalorder %s20, 1
      %s364 = scalar_select %p363, %s20, 1
      %s365 = scalar_lea.vmem %s3, %s364
      // Predicated region
      $region33: #{dice_loss2.1} parent=27 // pred_check
        %p366 = pneg %p112
      $region34: #{dice_loss2.1} parent=27 // pred_check_branch
        %368 = sbr.rel (%p366) target = $region36
      $region35: #{dice_loss2.1} parent=27 // pred_region
        _
      $region36: #{dice_loss2.1} parent=27 // pred_fallthru
        _
      // Predicated region
      $region37: #{dice_loss2.1} parent=27 // pred_check
        %p369 = pneg %p138
      $region38: #{dice_loss2.1} parent=27 // pred_check_branch
        %371 = sbr.rel (%p369) target = $region40
      $region39: #{dice_loss2.1} parent=27 // pred_region
        _
      $region40: #{dice_loss2.1} parent=27 // pred_fallthru
        _
    $region28: #{dice_loss2.1} parent=5 // pred_fallthru
      _
    %p372 = scmp.le.s32.totalorder 2, %s10
    // Predicated region
    $region41: #{dice_loss2.1} parent=5 // pred_check
      %p373 = pneg %p372
    $region42: #{dice_loss2.1} parent=5 // pred_check_branch
      %375 = sbr.rel (%p373) target = $region44
    $region43: #{dice_loss2.1} parent=5 // pred_region
      %s376 = ssub.s32 %s10, 2
      // Predicated region
      $region45: #{dice_loss2.1} parent=43 // pred_check
        %p377 = pneg %p118
      $region46: #{dice_loss2.1} parent=43 // pred_check_branch
        %379 = sbr.rel (%p377) target = $region48
      $region47: #{dice_loss2.1} parent=43 // pred_region
        %p380 = scmp.lt.s32.totalorder %s23, 1
        %s381 = scalar_select %p380, %s23, 1
        %s382 = scalar_lea.vmem %s2, %s381
      $region48: #{dice_loss2.1} parent=43 // pred_fallthru
        _
      // Predicated region
      $region49: #{dice_loss2.1} parent=43 // pred_check
        %p383 = pneg %p144
      $region50: #{dice_loss2.1} parent=43 // pred_check_branch
        %385 = sbr.rel (%p383) target = $region52
      $region51: #{dice_loss2.1} parent=43 // pred_region
        %p386 = scmp.lt.s32.totalorder %s23, 1
        %s387 = scalar_select %p386, %s23, 1
        %s388 = scalar_lea.vmem %s3, %s387
      $region52: #{dice_loss2.1} parent=43 // pred_fallthru
        _
    $region44: #{dice_loss2.1} parent=5 // pred_fallthru
      _
  $region6: #{dice_loss2.1} parent=0 // loop_footer
    %s14 = sadd.s32 1, %s10
  $region7: #{dice_loss2.1} parent=0 // loop_footer_branch
    %9 = sbr.rel target = $region3
  $region8: #{dice_loss2.1} parent=0 // loop_exit
    _

</llo_original>
